<compile_context>
chip_gen: v6e
topology: v6e:2x2x1
jax: 0.10.0
libtpu: 0.0.40
codegen_flags: <defaults>
</compile_context>

<pallas_src>
import functools

import jax
import jax.numpy as jnp
from jax.experimental import pallas as pl
from jax.experimental.pallas import tpu as pltpu

_MAX_LANES = 1024       # preferred lane-dense last dim (multiple of 128)
_MAX_BLOCK_ROWS = 1024  # (1024, 1024) f32 tile = 4 MiB


def _round_up(v: int, m: int) -> int:
    return ((v + m - 1) // m) * m


def _add_scalar_kernel(delta, x_ref, o_ref):
    # Single VPU add per vreg; `delta` is a compile-time Python scalar literal.
    o_ref[...] = x_ref[...] + delta


def _tiled_add(a2d: jax.Array, delta) -> jax.Array:
    """Elementwise `a2d + delta` over a lane-dense (rows, lanes) slab."""
    rows, lanes = a2d.shape
    if rows <= 32:
        # Single block covering the full extent (always a legal tiling).
        block_rows = rows
    else:
        # >= 2 row-blocks so both v7x TensorCores get work; multiple of 32
        # sublanes (valid for f32/bf16/int8/fp8); capped for VMEM headroom.
        block_rows = min(_MAX_BLOCK_ROWS, _round_up(pl.cdiv(rows, 2), 32))
    grid = (pl.cdiv(rows, block_rows),)  # ragged last block is masked by Pallas

    kernel = functools.partial(_add_scalar_kernel, delta)
    return pl.pallas_call(
        kernel,
        out_shape=jax.ShapeDtypeStruct((rows, lanes), a2d.dtype),
        grid_spec=pltpu.PrefetchScalarGridSpec(
            num_scalar_prefetch=0,
            grid=grid,
            in_specs=[pl.BlockSpec((block_rows, lanes), lambda i: (i, 0))],
            out_specs=pl.BlockSpec((block_rows, lanes), lambda i: (i, 0)),
        ),
        compiler_params=pltpu.CompilerParams(
            dimension_semantics=("parallel",),      # shard tiles across TCs (v7x)
            vmem_limit_bytes=48 * 1024 * 1024,      # tiles use <= ~16 MiB
        ),
    )(a2d)


def _add_scalar(a: jax.Array, delta_t) -> jax.Array:
    """a + delta_t via a tiled, lane-dense Pallas kernel (dtype preserved)."""
    if jnp.issubdtype(a.dtype, jnp.floating):
        delta = float(delta_t)   # weak-typed literal -> no upcast of bf16/f32
    else:
        delta = int(delta_t)

    orig_shape = a.shape
    n = a.size
    if n == 0:
        return a
    flat = a.reshape(-1)         # free bitcast of a contiguous array

    lanes = next((c for c in (_MAX_LANES, 512, 256, 128) if n % c == 0), None)
    if lanes is None:
        # Rare: total size not a multiple of 128 lanes.  Pad to the next lane
        # boundary and slice the tail off (one extra HBM pass each way, but
        # only on this fallback path).
        # TODO(synk): zero-copy handling of non-128-divisible sizes.
        padded_n = _round_up(n, 128)
        flat = jnp.pad(flat, (0, padded_n - n))
        out2d = _tiled_add(flat.reshape(padded_n // 128, 128), delta)
        return out2d.reshape(-1)[:n].reshape(orig_shape)

    out2d = _tiled_add(flat.reshape(n // lanes, lanes), delta)
    return out2d.reshape(orig_shape)   # free bitcast back


@functools.partial(jax.jit, static_argnames=("delta_t",))
def phoo_pangu_forward(x: jax.Array, x_surface: jax.Array, delta_t: int = 24):
    """JAX/Pallas equivalent of PhooPanguModel(delta_t).forward(x, x_surface)."""
    return (_add_scalar(x, delta_t), _add_scalar(x_surface, delta_t))


if __name__ == "__main__":
    key = jax.random.PRNGKey(0)
    k1, k2 = jax.random.split(key)

    # Small shapes in the spirit of Pangu-Weather inputs:
    #   x:         upper-air variables  [B, C, Z, H, W]
    #   x_surface: surface variables    [B, C, H, W]
    x = jax.random.normal(k1, (2, 5, 4, 16, 16), dtype=jnp.float32)
    x_surface = jax.random.normal(k2, (2, 4, 16, 16), dtype=jnp.float32)

    delta_t = 24
    out_x, out_surface = phoo_pangu_forward(x, x_surface, delta_t=delta_t)
    out_x = jax.block_until_ready(out_x)
    out_surface = jax.block_until_ready(out_surface)

    # Correctness check against pure-JAX reference.
    ref_x = x + delta_t
    ref_surface = x_surface + delta_t
    assert out_x.shape == x.shape and out_x.dtype == x.dtype
    assert out_surface.shape == x_surface.shape and out_surface.dtype == x_surface.dtype
    assert jnp.allclose(out_x, ref_x)
    assert jnp.allclose(out_surface, ref_surface)

    print("KERNEL_OK")
</pallas_src>

<mosaic_0001>
module attributes {stable_mosaic.version = 11 : i64} {
  func.func @_add_scalar_kernel(%arg0: i32, %arg1: memref<10x1024xf32, #tpu.memory_space<vmem>>, %arg2: memref<10x1024xf32, #tpu.memory_space<vmem>>) attributes {dimension_semantics = [#tpu.dimension_semantics<parallel>], iteration_bounds = array<i64: 1>, scalar_prefetch = 0 : i64, scratch_operands = 0 : i64, tpu.core_type = #tpu.core_type<tc>, window_params = [{transform_indices = @transform_0, window_bounds = array<i64: 10, 1024>}, {transform_indices = @transform_1, window_bounds = array<i64: 10, 1024>}]} {
    %c0 = arith.constant 0 : index
    %c0_0 = arith.constant 0 : index
    %0 = vector.load %arg1[%c0, %c0_0] : memref<10x1024xf32, #tpu.memory_space<vmem>>, vector<10x1024xf32>
    %cst = arith.constant 2.400000e+01 : f32
    %1 = vector.broadcast %cst : f32 to vector<10x1024xf32>
    %2 = arith.addf %0, %1 : vector<10x1024xf32>
    %c0_1 = arith.constant 0 : index
    %c0_2 = arith.constant 0 : index
    %3 = vector.load %arg2[%c0_1, %c0_2] : memref<10x1024xf32, #tpu.memory_space<vmem>>, vector<10x1024xf32>
    tpu.vector_store %arg2[%c0_1, %c0_2], %2 {strides = array<i32>} : memref<10x1024xf32, #tpu.memory_space<vmem>>, vector<10x1024xf32>,
    return
  }
  func.func @transform_0(%arg0: i32) -> (i32, i32) {
    %c0_i32 = arith.constant 0 : i32
    %c0_i32_0 = arith.constant 0 : i32
    return %arg0, %c0_i32 : i32, i32
  }
  func.func @transform_1(%arg0: i32) -> (i32, i32) {
    %c0_i32 = arith.constant 0 : i32
    %c0_i32_0 = arith.constant 0 : i32
    return %arg0, %c0_i32 : i32, i32
  }
}

module attributes {stable_mosaic.version = 11 : i64} {
  func.func @_add_scalar_kernel(%arg0: i32, %arg1: memref<2x1024xf32, #tpu.memory_space<vmem>>, %arg2: memref<2x1024xf32, #tpu.memory_space<vmem>>) attributes {dimension_semantics = [#tpu.dimension_semantics<parallel>], iteration_bounds = array<i64: 1>, scalar_prefetch = 0 : i64, scratch_operands = 0 : i64, tpu.core_type = #tpu.core_type<tc>, window_params = [{transform_indices = @transform_0, window_bounds = array<i64: 2, 1024>}, {transform_indices = @transform_1, window_bounds = array<i64: 2, 1024>}]} {
    %c0 = arith.constant 0 : index
    %c0_0 = arith.constant 0 : index
    %0 = vector.load %arg1[%c0, %c0_0] : memref<2x1024xf32, #tpu.memory_space<vmem>>, vector<2x1024xf32>
    %cst = arith.constant 2.400000e+01 : f32
    %1 = vector.broadcast %cst : f32 to vector<2x1024xf32>
    %2 = arith.addf %0, %1 : vector<2x1024xf32>
    %c0_1 = arith.constant 0 : index
    %c0_2 = arith.constant 0 : index
    %3 = vector.load %arg2[%c0_1, %c0_2] : memref<2x1024xf32, #tpu.memory_space<vmem>>, vector<2x1024xf32>
    tpu.vector_store %arg2[%c0_1, %c0_2], %2 {strides = array<i32>} : memref<2x1024xf32, #tpu.memory_space<vmem>>, vector<2x1024xf32>,
    return
  }
  func.func @transform_0(%arg0: i32) -> (i32, i32) {
    %c0_i32 = arith.constant 0 : i32
    %c0_i32_0 = arith.constant 0 : i32
    return %arg0, %c0_i32 : i32, i32
  }
  func.func @transform_1(%arg0: i32) -> (i32, i32) {
    %c0_i32 = arith.constant 0 : i32
    %c0_i32_0 = arith.constant 0 : i32
    return %arg0, %c0_i32 : i32, i32
  }
}

</mosaic_0001>

<llo_original>
// kernel: phoo_pangu_forward.2
$region0: #{phoo_pangu_forward.2}
  #allocation0 [shape = 'u32[]', space=smem, size = 0x4, offset = 0x4, fixed_abs, tag = 'smem constant byte address 0x4 - core index']
  #allocation1 [shape = 'u32[144,128]{1,0:T(1,128)}', space=vmem, size = 0x12000, scoped, tag = 'internal scratch']
  %s0 = inlined_call_operand.vmem [shape: f32[10,1024], index: 0, kind: input, shape index: {}]
  %s1 = inlined_call_operand.vmem [shape: f32[10,1024], index: 1, kind: output, shape index: {}]
  %s2 = sld [smem:[#allocation0]]
  $region14: #{phoo_pangu_forward.2} parent=0
    _
  %s4 = ssub.s32 1, %s2
  %s5 = scalar_select 0, %s4, %s2
  // Predicated region
  $region2: #{phoo_pangu_forward.2} parent=0 // pred_check
    _
  $region3: #{phoo_pangu_forward.2} parent=0 // pred_check_branch
    %7 = sbr.rel (0) target = $region5
  $region4: #{phoo_pangu_forward.2} parent=0 // pred_region
    _
  $region5: #{phoo_pangu_forward.2} parent=0 // pred_fallthru
    _
  %v8 = vld [vmem:[%s0] sm:$0xff]
  %v9 = vld [vmem:[%s0 + $0x8] sm:$0xff]
  %v10 = vld [vmem:[%s0 + $0x10] sm:$0xff]
  %v11 = vld [vmem:[%s0 + $0x18] sm:$0xff]
  %v12 = vld [vmem:[%s0 + $0x20] sm:$0xff]
  %v13 = vld [vmem:[%s0 + $0x28] sm:$0xff]
  %v14 = vld [vmem:[%s0 + $0x30] sm:$0xff]
  %v15 = vld [vmem:[%s0 + $0x38] sm:$0xff]
  %v16 = vld [vmem:[%s0 + $0x40] sm:$0x3]
  %v17 = vld [vmem:[%s0 + $0x48] sm:$0x3]
  %v18 = vld [vmem:[%s0 + $0x50] sm:$0x3]
  %v19 = vld [vmem:[%s0 + $0x58] sm:$0x3]
  %v20 = vld [vmem:[%s0 + $0x60] sm:$0x3]
  %v21 = vld [vmem:[%s0 + $0x68] sm:$0x3]
  %v22 = vld [vmem:[%s0 + $0x70] sm:$0x3]
  %v23 = vld [vmem:[%s0 + $0x78] sm:$0x3]
  %v24 = vadd.f32 %v8, 24.0
  %v25 = vadd.f32 %v9, 24.0
  %v26 = vadd.f32 %v10, 24.0
  %v27 = vadd.f32 %v11, 24.0
  %v28 = vadd.f32 %v12, 24.0
  %v29 = vadd.f32 %v13, 24.0
  %v30 = vadd.f32 %v14, 24.0
  %v31 = vadd.f32 %v15, 24.0
  %v32 = vadd.f32 %v16, 24.0
  %v33 = vadd.f32 %v17, 24.0
  %v34 = vadd.f32 %v18, 24.0
  %v35 = vadd.f32 %v19, 24.0
  %v36 = vadd.f32 %v20, 24.0
  %v37 = vadd.f32 %v21, 24.0
  %v38 = vadd.f32 %v22, 24.0
  %v39 = vadd.f32 %v23, 24.0
  %40 = vst [vmem:[%s1] sm:$0xff] %v24
  %41 = vst [vmem:[%s1 + $0x8] sm:$0xff] %v25
  %42 = vst [vmem:[%s1 + $0x10] sm:$0xff] %v26
  %43 = vst [vmem:[%s1 + $0x18] sm:$0xff] %v27
  %44 = vst [vmem:[%s1 + $0x20] sm:$0xff] %v28
  %45 = vst [vmem:[%s1 + $0x28] sm:$0xff] %v29
  %46 = vst [vmem:[%s1 + $0x30] sm:$0xff] %v30
  %47 = vst [vmem:[%s1 + $0x38] sm:$0xff] %v31
  %48 = vst [vmem:[%s1 + $0x40] sm:$0x3] %v32
  %49 = vst [vmem:[%s1 + $0x48] sm:$0x3] %v33
  %50 = vst [vmem:[%s1 + $0x50] sm:$0x3] %v34
  %51 = vst [vmem:[%s1 + $0x58] sm:$0x3] %v35
  %52 = vst [vmem:[%s1 + $0x60] sm:$0x3] %v36
  %53 = vst [vmem:[%s1 + $0x68] sm:$0x3] %v37
  %54 = vst [vmem:[%s1 + $0x70] sm:$0x3] %v38
  %55 = vst [vmem:[%s1 + $0x78] sm:$0x3] %v39
  // Predicated region
  $region6: #{phoo_pangu_forward.2} parent=0 // pred_check
    _
  $region7: #{phoo_pangu_forward.2} parent=0 // pred_check_branch
    %57 = sbr.rel (0) target = $region9
  $region8: #{phoo_pangu_forward.2} parent=0 // pred_region
    _
  $region9: #{phoo_pangu_forward.2} parent=0 // pred_fallthru
    _
  // Predicated region
  $region10: #{phoo_pangu_forward.2} parent=0 // pred_check
    _
  $region11: #{phoo_pangu_forward.2} parent=0 // pred_check_branch
    %59 = sbr.rel (0) target = $region13
  $region12: #{phoo_pangu_forward.2} parent=0 // pred_region
    _
  $region13: #{phoo_pangu_forward.2} parent=0 // pred_fallthru
    _

// kernel: phoo_pangu_forward.3
$region0: #{phoo_pangu_forward.3}
  #allocation0 [shape = 'u32[]', space=smem, size = 0x4, offset = 0x4, fixed_abs, tag = 'smem constant byte address 0x4 - core index']
  #allocation1 [shape = 'u32[144,128]{1,0:T(1,128)}', space=vmem, size = 0x12000, scoped, tag = 'internal scratch']
  %s0 = inlined_call_operand.vmem [shape: f32[2,1024], index: 0, kind: input, shape index: {}]
  %s1 = inlined_call_operand.vmem [shape: f32[2,1024], index: 1, kind: output, shape index: {}]
  %s2 = sld [smem:[#allocation0]]
  $region14: #{phoo_pangu_forward.3} parent=0
    _
  %s4 = ssub.s32 1, %s2
  %s5 = scalar_select 0, %s4, %s2
  // Predicated region
  $region2: #{phoo_pangu_forward.3} parent=0 // pred_check
    _
  $region3: #{phoo_pangu_forward.3} parent=0 // pred_check_branch
    %7 = sbr.rel (0) target = $region5
  $region4: #{phoo_pangu_forward.3} parent=0 // pred_region
    _
  $region5: #{phoo_pangu_forward.3} parent=0 // pred_fallthru
    _
  %v8 = vld [vmem:[%s0] sm:$0xff]
  %v9 = vld [vmem:[%s0 + $0x8] sm:$0xff]
  %v10 = vadd.f32 %v8, 24.0
  %v11 = vadd.f32 %v9, 24.0
  %12 = vst [vmem:[%s1] sm:$0xff] %v10
  %13 = vst [vmem:[%s1 + $0x8] sm:$0xff] %v11
  // Predicated region
  $region6: #{phoo_pangu_forward.3} parent=0 // pred_check
    _
  $region7: #{phoo_pangu_forward.3} parent=0 // pred_check_branch
    %15 = sbr.rel (0) target = $region9
  $region8: #{phoo_pangu_forward.3} parent=0 // pred_region
    _
  $region9: #{phoo_pangu_forward.3} parent=0 // pred_fallthru
    _
  // Predicated region
  $region10: #{phoo_pangu_forward.3} parent=0 // pred_check
    _
  $region11: #{phoo_pangu_forward.3} parent=0 // pred_check_branch
    %17 = sbr.rel (0) target = $region13
  $region12: #{phoo_pangu_forward.3} parent=0 // pred_region
    _
  $region13: #{phoo_pangu_forward.3} parent=0 // pred_fallthru
    _

</llo_original>
